<compile_context>
chip_gen: v7x
topology: tpu7x:2x2x1
jax: 0.10.0
libtpu: 0.0.40
codegen_flags: <defaults>
</compile_context>

<pallas_src>
import jax
import jax.numpy as jnp
from jax.experimental import pallas as pl
from jax.experimental.pallas import tpu as pltpu


def _shift_left(a, k):
    """`a` shifted left by k along the lane axis (tail lanes hold don't-care wrap values)."""
    return jnp.concatenate([a[..., k:], a[..., :k]], axis=-1)


def _maxpool3d_kernel(x_ref, o_ref):
    """x_ref: (bt, 2*dt, 2*ht, 2*Wo) input block; o_ref: (bt, dt, ht, Wo) output block."""
    bt, dt, ht, Wo = o_ref.shape

    # --- Height pooling: two stride-2 sublane reads straight from the VMEM block -----
    v = jnp.maximum(
        x_ref[:, :, pl.ds(0, ht, stride=2), :],
        x_ref[:, :, pl.ds(1, ht, stride=2), :],
    )                                                     # (bt, 2*dt, ht, 2*Wo)

    # --- Depth pooling: pure leading-dim regroup (no relayout) + max -----------------
    v = v.reshape(bt, dt, 2, ht, v.shape[-1])
    v = jnp.maximum(v[:, :, 0], v[:, :, 1])               # (bt, dt, ht, 2*Wo)

    # --- Width pooling ----------------------------------------------------------------
    # 1) adjacent-lane max: valid results live at even lanes.
    v = jnp.maximum(v, _shift_left(v, 1))                 # pair-max at lanes 0,2,4,...
    # 2) compact even lanes into the first Wo lanes with a log2(Wo)-step barrel shift
    #    (O(log Wo) lane rotates + selects per vreg instead of O(Wo) masked slices).
    lane = jax.lax.broadcasted_iota(jnp.int32, v.shape, dimension=3)
    k = 1
    while k < Wo:
        v = jnp.where((lane & k) != 0, _shift_left(v, k), v)
        k *= 2

    o_ref[...] = v[..., :Wo].astype(o_ref.dtype)


def _round_up(x, m):
    return ((x + m - 1) // m) * m


def complex_max_pool3d(x, *, target_block_bytes=8 * 1024 * 1024):
    """Pallas equivalent of ComplexMaxPool3D.forward.

    x: (N, 2, C, D, H, W)  (PyTorch layout, real/imag at dim 1)
    returns: (N, 2, C, D//2, H//2, W//2), same dtype as x.
    """
    N, two, C, D, H, W = x.shape
    if two != 2:
        raise ValueError("expected the real/imag axis (size 2) at dim 1")
    Do, Ho, Wo = D // 2, H // 2, W // 2
    if min(Do, Ho, Wo) == 0:
        raise ValueError("spatial dims must be >= 2 for kernel_size=2, stride=2")
    # torch.nn.MaxPool3d(2, 2) floors odd spatial extents: crop only when needed.
    if (D, H, W) != (2 * Do, 2 * Ho, 2 * Wo):
        x = x[:, :, :, : 2 * Do, : 2 * Ho, : 2 * Wo]

    # Free reshape (merges leading dims only): real/imag and channels fold into batch.
    B = N * 2 * C
    xb = x.reshape(B, 2 * Do, 2 * Ho, 2 * Wo)

    itemsize = x.dtype.itemsize
    sub_m = 8 * max(1, 4 // itemsize)        # sublane tile: f32 -> 8, bf16 -> 16, int8 -> 32
    lane_m = 128

    # Padded-VMEM bytes of one (b, single-d) plane of the *input* block.
    def in_plane_bytes(ht_):
        return _round_up(2 * ht_, sub_m) * _round_up(2 * Wo, lane_m) * itemsize

    # --- Tile sizing (padded-byte aware, no divisibility requirement) ----------------
    ht = Ho
    win_bytes = 2 * in_plane_bytes(ht)       # minimal (bt=1, dt=1) input block
    if win_bytes > target_block_bytes and Ho > sub_m:
        # H-tiling fallback for very large H*W planes: keep ht a multiple of the sublane
        # tile so both the 2*ht input rows and the ht output rows stay aligned.
        max_rows = target_block_bytes // (2 * _round_up(2 * Wo, lane_m) * itemsize)
        ht = max(sub_m, ((max_rows // 2) // sub_m) * sub_m)
        ht = min(ht, Ho)
        win_bytes = 2 * in_plane_bytes(ht)

    dt = max(1, min(Do, target_block_bytes // win_bytes))
    bt = max(1, min(B, target_block_bytes // (dt * win_bytes)))

    # Keep >= 4 grid steps so the "parallel" axes can feed both v7x TensorCores.
    while (pl.cdiv(B, bt) * pl.cdiv(Do, dt) * pl.cdiv(Ho, ht) < 4) and (bt > 1 or dt > 1):
        if bt >= dt and bt > 1:
            bt = -(-bt // 2)
        else:
            dt = -(-dt // 2)

    # --- VMEM footprint: 2 pipeline buffers per operand + ~2x input block of temps ---
    p_in = bt * 2 * dt * in_plane_bytes(ht)
    p_out = bt * dt * _round_up(ht, sub_m) * _round_up(Wo, lane_m) * itemsize
    footprint = 2 * (p_in + p_out) + 2 * p_in + (2 << 20)
    try:
        phys_vmem = int(pltpu.get_tpu_info().vmem_capacity_bytes)
    except Exception:
        phys_vmem = 64 << 20                  # conservative (v7x per-TC VMEM)
    vmem_cap = max(32 << 20, phys_vmem - (8 << 20))
    vmem_limit = int(min(vmem_cap, max(32 << 20, footprint)))

    grid = (pl.cdiv(B, bt), pl.cdiv(Do, dt), pl.cdiv(Ho, ht))
    out = pl.pallas_call(
        _maxpool3d_kernel,
        out_shape=jax.ShapeDtypeStruct((B, Do, Ho, Wo), x.dtype),
        grid=grid,
        in_specs=[
            pl.BlockSpec((bt, 2 * dt, 2 * ht, 2 * Wo), lambda b, d, h: (b, d, h, 0)),
        ],
        out_specs=pl.BlockSpec((bt, dt, ht, Wo), lambda b, d, h: (b, d, h, 0)),
        compiler_params=pltpu.CompilerParams(
            dimension_semantics=("parallel", "parallel", "parallel"),
            vmem_limit_bytes=vmem_limit,
        ),
    )(xb)

    # Free reshape back (splits leading dim only) to the PyTorch layout.
    return out.reshape(N, 2, C, Do, Ho, Wo)


def _reference_pool(x):
    # Pure-JAX reference of torch.stack((MP(x[:, 0]), MP(x[:, 1])), dim=1).
    N, two, C, D, H, W = x.shape
    Do, Ho, Wo = D // 2, H // 2, W // 2
    xr = x[:, :, :, : 2 * Do, : 2 * Ho, : 2 * Wo]
    xr = xr.reshape(N, two, C, Do, 2, Ho, 2, Wo, 2)
    return xr.max(axis=(4, 6, 8))


if __name__ == "__main__":
    # ComplexMaxPool3D has no learnable parameters.
    key = jax.random.PRNGKey(0)
    x = jax.random.normal(key, (2, 2, 4, 8, 8, 8), dtype=jnp.float32)

    y = jax.block_until_ready(complex_max_pool3d(x))

    y_ref = _reference_pool(x)
    assert y.shape == (2, 2, 4, 4, 4, 4), y.shape
    assert y.dtype == x.dtype
    assert jnp.allclose(y, y_ref), "Pallas output mismatch vs reference"

    print("KERNEL_OK")
</pallas_src>

<mosaic_0001>
module attributes {stable_mosaic.version = 11 : i64} {
  func.func @_maxpool3d_kernel(%arg0: i32, %arg1: i32, %arg2: i32, %arg3: memref<4x8x8x8xf32, #tpu.memory_space<vmem>>, %arg4: memref<4x4x4x4xf32, #tpu.memory_space<vmem>>) attributes {dimension_semantics = [#tpu.dimension_semantics<parallel>, #tpu.dimension_semantics<parallel>, #tpu.dimension_semantics<parallel>], iteration_bounds = array<i64: 4, 1, 1>, scalar_prefetch = 0 : i64, scratch_operands = 0 : i64, tpu.core_type = #tpu.core_type<tc>, window_params = [{transform_indices = @transform_0, window_bounds = array<i64: 4, 8, 8, 8>}, {transform_indices = @transform_1, window_bounds = array<i64: 4, 4, 4, 4>}]} {
    %c0 = arith.constant 0 : index
    %c0_0 = arith.constant 0 : index
    %c0_1 = arith.constant 0 : index
    %c0_2 = arith.constant 0 : index
    %0 = tpu.strided_load %arg3[%c0, %c0_0, %c0_1, %c0_2] {strides = array<i32: 1, 1, 2, 1>} : memref<4x8x8x8xf32, #tpu.memory_space<vmem>>, vector<4x8x4x8xf32>
    %c0_3 = arith.constant 0 : index
    %c0_4 = arith.constant 0 : index
    %c1 = arith.constant 1 : index
    %c0_5 = arith.constant 0 : index
    %1 = tpu.strided_load %arg3[%c0_3, %c0_4, %c1, %c0_5] {strides = array<i32: 1, 1, 2, 1>} : memref<4x8x8x8xf32, #tpu.memory_space<vmem>>, vector<4x8x4x8xf32>
    %2 = arith.maximumf %0, %1 : vector<4x8x4x8xf32>
    %3 = vector.shape_cast %2 : vector<4x8x4x8xf32> to vector<4x4x2x4x8xf32>
    %4 = vector.extract_strided_slice %3 {offsets = [0, 0, 0, 0, 0], sizes = [4, 4, 1, 4, 8], strides = [1, 1, 1, 1, 1]} : vector<4x4x2x4x8xf32> to vector<4x4x1x4x8xf32>
    %5 = vector.shape_cast %4 : vector<4x4x1x4x8xf32> to vector<4x4x4x8xf32>
    %6 = vector.extract_strided_slice %3 {offsets = [0, 0, 1, 0, 0], sizes = [4, 4, 1, 4, 8], strides = [1, 1, 1, 1, 1]} : vector<4x4x2x4x8xf32> to vector<4x4x1x4x8xf32>
    %7 = vector.shape_cast %6 : vector<4x4x1x4x8xf32> to vector<4x4x4x8xf32>
    %8 = arith.maximumf %5, %7 : vector<4x4x4x8xf32>
    %9 = vector.extract_strided_slice %8 {offsets = [0, 0, 0, 1], sizes = [4, 4, 4, 7], strides = [1, 1, 1, 1]} : vector<4x4x4x8xf32> to vector<4x4x4x7xf32>
    %10 = vector.extract_strided_slice %8 {offsets = [0, 0, 0, 0], sizes = [4, 4, 4, 1], strides = [1, 1, 1, 1]} : vector<4x4x4x8xf32> to vector<4x4x4x1xf32>
    %11 = tpu.concatenate %9, %10 in 3 : vector<4x4x4x7xf32>, vector<4x4x4x1xf32> -> vector<4x4x4x8xf32>
    %12 = arith.maximumf %8, %11 : vector<4x4x4x8xf32>
    %13 = tpu.iota {dimensions = array<i32: 3>} : vector<4x4x4x8xi32>
    %c1_i32 = arith.constant 1 : i32
    %14 = vector.broadcast %c1_i32 : i32 to vector<4x4x4x8xi32>
    %15 = arith.andi %13, %14 : vector<4x4x4x8xi32>
    %c0_i32 = arith.constant 0 : i32
    %16 = vector.broadcast %c0_i32 : i32 to vector<4x4x4x8xi32>
    %17 = arith.cmpi ne, %15, %16 : vector<4x4x4x8xi32>
    %18 = vector.extract_strided_slice %12 {offsets = [0, 0, 0, 1], sizes = [4, 4, 4, 7], strides = [1, 1, 1, 1]} : vector<4x4x4x8xf32> to vector<4x4x4x7xf32>
    %19 = vector.extract_strided_slice %12 {offsets = [0, 0, 0, 0], sizes = [4, 4, 4, 1], strides = [1, 1, 1, 1]} : vector<4x4x4x8xf32> to vector<4x4x4x1xf32>
    %20 = tpu.concatenate %18, %19 in 3 : vector<4x4x4x7xf32>, vector<4x4x4x1xf32> -> vector<4x4x4x8xf32>
    %21 = arith.select %17, %20, %12 : vector<4x4x4x8xi1>, vector<4x4x4x8xf32>
    %c2_i32 = arith.constant 2 : i32
    %22 = vector.broadcast %c2_i32 : i32 to vector<4x4x4x8xi32>
    %23 = arith.andi %13, %22 : vector<4x4x4x8xi32>
    %c0_i32_6 = arith.constant 0 : i32
    %24 = vector.broadcast %c0_i32_6 : i32 to vector<4x4x4x8xi32>
    %25 = arith.cmpi ne, %23, %24 : vector<4x4x4x8xi32>
    %26 = vector.extract_strided_slice %21 {offsets = [0, 0, 0, 2], sizes = [4, 4, 4, 6], strides = [1, 1, 1, 1]} : vector<4x4x4x8xf32> to vector<4x4x4x6xf32>
    %27 = vector.extract_strided_slice %21 {offsets = [0, 0, 0, 0], sizes = [4, 4, 4, 2], strides = [1, 1, 1, 1]} : vector<4x4x4x8xf32> to vector<4x4x4x2xf32>
    %28 = tpu.concatenate %26, %27 in 3 : vector<4x4x4x6xf32>, vector<4x4x4x2xf32> -> vector<4x4x4x8xf32>
    %29 = arith.select %25, %28, %21 : vector<4x4x4x8xi1>, vector<4x4x4x8xf32>
    %30 = vector.extract_strided_slice %29 {offsets = [0, 0, 0, 0], sizes = [4, 4, 4, 4], strides = [1, 1, 1, 1]} : vector<4x4x4x8xf32> to vector<4x4x4x4xf32>
    %c0_7 = arith.constant 0 : index
    %c0_8 = arith.constant 0 : index
    %c0_9 = arith.constant 0 : index
    %c0_10 = arith.constant 0 : index
    %31 = vector.load %arg4[%c0_7, %c0_8, %c0_9, %c0_10] : memref<4x4x4x4xf32, #tpu.memory_space<vmem>>, vector<4x4x4x4xf32>
    tpu.vector_store %arg4[%c0_7, %c0_8, %c0_9, %c0_10], %30 {strides = array<i32>} : memref<4x4x4x4xf32, #tpu.memory_space<vmem>>, vector<4x4x4x4xf32>,
    return
  }
  func.func @transform_0(%arg0: i32, %arg1: i32, %arg2: i32) -> (i32, i32, i32, i32) {
    %c0_i32 = arith.constant 0 : i32
    %c0_i32_0 = arith.constant 0 : i32
    return %arg0, %arg1, %arg2, %c0_i32 : i32, i32, i32, i32
  }
  func.func @transform_1(%arg0: i32, %arg1: i32, %arg2: i32) -> (i32, i32, i32, i32) {
    %c0_i32 = arith.constant 0 : i32
    %c0_i32_0 = arith.constant 0 : i32
    return %arg0, %arg1, %arg2, %c0_i32 : i32, i32, i32, i32
  }
}

</mosaic_0001>

<llo_original>
// kernel: tpu_custom_call.1
$region0: #{tpu_custom_call.1}
  #allocation0 [shape = 'u32[]', space=smem, size = 0x4, offset = 0x4, fixed_abs, tag = 'smem constant byte address 0x4 - core index']
  #allocation1 [shape = 'u32[144,128]{1,0:T(1,128)}', space=vmem, size = 0x12000, scoped, tag = 'internal scratch']
  %s0 = inlined_call_operand.vmem [shape: f32[16,8,8,8], index: 0, kind: input, shape index: {}]
  %s1 = inlined_call_operand.vmem [shape: f32[16,4,4,4], index: 1, kind: output, shape index: {}]
  %s2 = sld [smem:[#allocation0]]
  $region37: #{tpu_custom_call.1} parent=0
    _
  %s4 = ssub.s32 1, %s2
  %s5 = scalar_select 0, %s4, %s2
  loop: start=0, step=1, limit=6
  $region2: #{tpu_custom_call.1} parent=0 // loop_pre_header
    _
  $region3: #{tpu_custom_call.1} parent=0 // loop_header
    %s7 = sphi 0, %s11
    %p8 = scmp.ge.s32.totalorder %s7, 6
    %s14 = sphi 0, %s33
    %s15 = sphi 0, %s29
    %s16 = sphi 0, %s25
    %s17 = sphi 0, %s14
    %s18 = sphi 0, %s15
    %s19 = sphi 0, %s16
    %s20 = sphi 0, %s17
    %s21 = sphi 0, %s18
    %s22 = sphi 0, %s19
    %s40 = sphi 0, %s42
    %s43 = sphi 0, %s40
    %s44 = sphi 0, %s43
    %s60 = sphi 0, %s44
    %s70 = sphi 0, %s72
    %s73 = sphi 0, %s70
    %s74 = sphi 0, %s73
    %s90 = sphi 0, %s74
  $region4: #{tpu_custom_call.1} parent=0 // loop_header_branch
    %10 = sbr.rel (%p8) target = $region8
  $region5: #{tpu_custom_call.1} parent=0 // loop_body
    %s12 = ssub.s32 %s7, 1
    %s13 = ssub.s32 %s7, 2
    %s23 = sadd.s32 1, %s16
    %p24 = scmp.ge.s32.totalorder %s23, 1
    %s25 = scalar_select %p24, 0, %s23
    %s26 = sadd.s32 1, %s15
    %s27 = scalar_select %p24, %s26, %s15
    %p28 = scmp.ge.s32.totalorder %s27, 1
    %s29 = scalar_select %p28, 0, %s27
    %s30 = sadd.s32 1, %s14
    %s31 = scalar_select %p28, %s30, %s14
    %p32 = scmp.ge.s32.totalorder %s31, 4
    %s33 = scalar_select %p32, 0, %s31
    %s34 = ssub.s32 %s14, %s33
    %s35 = ssub.s32 %s15, %s29
    %s36 = sor.u32 %s34, %s35
    %s37 = ssub.s32 %s16, %s25
    %s38 = sor.u32 %s36, %s37
    %p39 = scmp.eq.s32.totalorder %s38, 0
    %s41 = sadd.s32 %s40, 1
    %s42 = scalar_select %p39, %s40, %s41
    %p45 = pneg %p39
    %p46 = scmp.eq.s32.totalorder %s7, 3
    %p47 = por %p45, %p46
    %p48 = scmp.ne.s32.totalorder %s40, %s43
    %p49 = scmp.eq.s32.totalorder %s7, 0
    %p50 = por %p48, %p49
    %p51 = scmp.ne.s32.totalorder %s40, %s43
    %p52 = scmp.eq.s32.totalorder %s12, 3
    %p53 = por %p51, %p52
    %p54 = scmp.ne.s32.totalorder %s43, %s44
    %p55 = scmp.eq.s32.totalorder %s12, 0
    %p56 = por %p54, %p55
    %p57 = scmp.ne.s32.totalorder %s43, %s44
    %p58 = scmp.eq.s32.totalorder %s13, 3
    %p59 = por %p57, %p58
    %p61 = scmp.ne.s32.totalorder %s44, %s60
    %p62 = scmp.eq.s32.totalorder %s13, 0
    %p63 = por %p61, %p62
    %s64 = ssub.s32 %s14, %s33
    %s65 = ssub.s32 %s15, %s29
    %s66 = sor.u32 %s64, %s65
    %s67 = ssub.s32 %s16, %s25
    %s68 = sor.u32 %s66, %s67
    %p69 = scmp.eq.s32.totalorder %s68, 0
    %s71 = sadd.s32 %s70, 1
    %s72 = scalar_select %p69, %s70, %s71
    %p75 = pneg %p69
    %p76 = scmp.eq.s32.totalorder %s7, 3
    %p77 = por %p75, %p76
    %p78 = scmp.ne.s32.totalorder %s70, %s73
    %p79 = scmp.eq.s32.totalorder %s7, 0
    %p80 = por %p78, %p79
    %p81 = scmp.ne.s32.totalorder %s70, %s73
    %p82 = scmp.eq.s32.totalorder %s12, 3
    %p83 = por %p81, %p82
    %p84 = scmp.ne.s32.totalorder %s73, %s74
    %p85 = scmp.eq.s32.totalorder %s12, 0
    %p86 = por %p84, %p85
    %p87 = scmp.ne.s32.totalorder %s73, %s74
    %p88 = scmp.eq.s32.totalorder %s13, 3
    %p89 = por %p87, %p88
    %p91 = scmp.ne.s32.totalorder %s74, %s90
    %p92 = scmp.eq.s32.totalorder %s13, 0
    %p93 = por %p91, %p92
    %p94 = scmp.le.s32.totalorder 1, %s7
    %p95 = scmp.lt.s32.totalorder %s7, 5
    %p96 = pnand %p94, %p95
    %p97 = pneg %p96
    // Predicated region
    $region9: #{tpu_custom_call.1} parent=5 // pred_check
      _
    $region10: #{tpu_custom_call.1} parent=5 // pred_check_branch
      %99 = sbr.rel (%p96) target = $region12
    $region11: #{tpu_custom_call.1} parent=5 // pred_region
      %s100 = ssub.s32 %s7, 1
    $region12: #{tpu_custom_call.1} parent=5 // pred_fallthru
      _
    %p101 = scmp.lt.s32.totalorder %s7, 4
    // Predicated region
    $region13: #{tpu_custom_call.1} parent=5 // pred_check
      %p102 = pneg %p101
    $region14: #{tpu_custom_call.1} parent=5 // pred_check_branch
      %104 = sbr.rel (%p102) target = $region16
    $region15: #{tpu_custom_call.1} parent=5 // pred_region
      // Predicated region
      $region17: #{tpu_custom_call.1} parent=15 // pred_check
        %p105 = pneg %p50
      $region18: #{tpu_custom_call.1} parent=15 // pred_check_branch
        %107 = sbr.rel (%p105) target = $region20
      $region19: #{tpu_custom_call.1} parent=15 // pred_region
        %s108 = smul.u32 4, %s14
        %s109 = smul.u32 8, %s15
        %p110 = scmp.lt.s32.totalorder %s108, 15
        %s111 = scalar_select %p110, %s108, 15
        %p112 = scmp.lt.s32.totalorder %s109, 7
        %s113 = scalar_select %p112, %s109, 7
        %p114 = scmp.lt.s32.totalorder %s16, 0
        %s115 = scalar_select %p114, %s16, 0
        %s116 = sadd.s32 %s115, %s113
        %s117 = smul.addr %s111, 8
        %s118 = sadd.s32 %s116, %s117
        %s119 = smul.addr %s118, 8
        %s120 = scalar_lea.vmem %s0, %s119
        %s121 = smul.u32 4, %s14
        %s122 = smul.u32 8, %s15
      $region20: #{tpu_custom_call.1} parent=15 // pred_fallthru
        _
    $region16: #{tpu_custom_call.1} parent=5 // pred_fallthru
      _
    %p123 = scmp.le.s32.totalorder 1, %s7
    %p124 = scmp.lt.s32.totalorder %s7, 5
    %p125 = pnand %p123, %p124
    %p126 = pneg %p125
    // Predicated region
    $region21: #{tpu_custom_call.1} parent=5 // pred_check
      _
    $region22: #{tpu_custom_call.1} parent=5 // pred_check_branch
      %128 = sbr.rel (%p125) target = $region24
    $region23: #{tpu_custom_call.1} parent=5 // pred_region
      %s129 = ssub.s32 %s7, 1
      %s130 = smul.u32 4, %s17
      %s131 = smul.u32 8, %s18
      %p132 = scmp.lt.s32.totalorder %s130, 15
      %s133 = scalar_select %p132, %s130, 15
      %p134 = scmp.lt.s32.totalorder %s131, 7
      %s135 = scalar_select %p134, %s131, 7
      %p136 = scmp.lt.s32.totalorder %s19, 0
      %s137 = scalar_select %p136, %s19, 0
      %s138 = sadd.s32 %s137, %s135
      %s139 = smul.addr %s133, 8
      %s140 = sadd.s32 %s138, %s139
      %s141 = smul.addr %s140, 8
      %s142 = scalar_lea.vmem %s0, %s141
      %p143 = pneg %p56
      %p144 = pneg %p53
      %p145 = pneg %p86
      %p146 = pneg %p83
      %s147 = smul.u32 4, %s17
      %s148 = smul.u32 4, %s18
      %p149 = scmp.lt.s32.totalorder %s147, 15
      %s150 = scalar_select %p149, %s147, 15
      %p151 = scmp.lt.s32.totalorder %s148, 3
      %s152 = scalar_select %p151, %s148, 3
      %p153 = scmp.lt.s32.totalorder %s19, 0
      %s154 = scalar_select %p153, %s19, 0
      %s155 = sadd.s32 %s154, %s152
      %s156 = smul.addr %s150, 4
      %s157 = sadd.s32 %s155, %s156
      %s158 = smul.addr %s157, 4
      %s159 = scalar_lea.vmem %s1, %s158
      %s160 = smul.u32 4, %s17
      %s161 = smul.u32 8, %s18
      %p162 = scmp.lt.s32.totalorder %s160, 15
      %s163 = scalar_select %p162, %s160, 15
      %p164 = scmp.lt.s32.totalorder %s161, 7
      %s165 = scalar_select %p164, %s161, 7
      %p166 = scmp.lt.s32.totalorder %s19, 0
      %s167 = scalar_select %p166, %s19, 0
      %s168 = sadd.s32 %s167, %s165
      %s169 = smul.addr %s163, 8
      %s170 = sadd.s32 %s168, %s169
      %s171 = smul.addr %s170, 8
      %s172 = scalar_lea.vmem %s0, %s171
      %s173 = smul.u32 4, %s17
      %s174 = smul.u32 8, %s18
      %s175 = smul.u32 4, %s17
      %s176 = smul.u32 4, %s18
      %p177 = scmp.lt.s32.totalorder %s175, 15
      %s178 = scalar_select %p177, %s175, 15
      %p179 = scmp.lt.s32.totalorder %s176, 3
      %s180 = scalar_select %p179, %s176, 3
      %p181 = scmp.lt.s32.totalorder %s19, 0
      %s182 = scalar_select %p181, %s19, 0
      %s183 = sadd.s32 %s182, %s180
      %s184 = smul.addr %s178, 4
      %s185 = sadd.s32 %s183, %s184
      %s186 = smul.addr %s185, 4
      %s187 = scalar_lea.vmem %s1, %s186
      %s188 = smul.u32 4, %s17
      %s189 = smul.u32 4, %s18
      %v190 = vld [vmem:[%s172] ss:$2 sm:$0xf]
      %s191 = scalar_lea.vmem %s172, 8
      %v192 = vld [vmem:[%s191] ss:$2 sm:$0xf]
      %s193 = scalar_lea.vmem %s172, 16
      %v194 = vld [vmem:[%s193] ss:$2 sm:$0xf]
      %s195 = scalar_lea.vmem %s172, 24
      %v196 = vld [vmem:[%s195] ss:$2 sm:$0xf]
      %s197 = scalar_lea.vmem %s172, 32
      %v198 = vld [vmem:[%s197] ss:$2 sm:$0xf]
      %s199 = scalar_lea.vmem %s172, 40
      %v200 = vld [vmem:[%s199] ss:$2 sm:$0xf]
      %s201 = scalar_lea.vmem %s172, 48
      %v202 = vld [vmem:[%s201] ss:$2 sm:$0xf]
      %s203 = scalar_lea.vmem %s172, 56
      %v204 = vld [vmem:[%s203] ss:$2 sm:$0xf]
      %s205 = scalar_lea.vmem %s172, 64
      %v206 = vld [vmem:[%s205] ss:$2 sm:$0xf]
      %s207 = scalar_lea.vmem %s172, 72
      %v208 = vld [vmem:[%s207] ss:$2 sm:$0xf]
      %s209 = scalar_lea.vmem %s172, 80
      %v210 = vld [vmem:[%s209] ss:$2 sm:$0xf]
      %s211 = scalar_lea.vmem %s172, 88
      %v212 = vld [vmem:[%s211] ss:$2 sm:$0xf]
      %s213 = scalar_lea.vmem %s172, 96
      %v214 = vld [vmem:[%s213] ss:$2 sm:$0xf]
      %s215 = scalar_lea.vmem %s172, 104
      %v216 = vld [vmem:[%s215] ss:$2 sm:$0xf]
      %s217 = scalar_lea.vmem %s172, 112
      %v218 = vld [vmem:[%s217] ss:$2 sm:$0xf]
      %s219 = scalar_lea.vmem %s172, 120
      %v220 = vld [vmem:[%s219] ss:$2 sm:$0xf]
      %s221 = scalar_lea.vmem %s172, 128
      %v222 = vld [vmem:[%s221] ss:$2 sm:$0xf]
      %s223 = scalar_lea.vmem %s172, 136
      %v224 = vld [vmem:[%s223] ss:$2 sm:$0xf]
      %s225 = scalar_lea.vmem %s172, 144
      %v226 = vld [vmem:[%s225] ss:$2 sm:$0xf]
      %s227 = scalar_lea.vmem %s172, 152
      %v228 = vld [vmem:[%s227] ss:$2 sm:$0xf]
      %s229 = scalar_lea.vmem %s172, 160
      %v230 = vld [vmem:[%s229] ss:$2 sm:$0xf]
      %s231 = scalar_lea.vmem %s172, 168
      %v232 = vld [vmem:[%s231] ss:$2 sm:$0xf]
      %s233 = scalar_lea.vmem %s172, 176
      %v234 = vld [vmem:[%s233] ss:$2 sm:$0xf]
      %s235 = scalar_lea.vmem %s172, 184
      %v236 = vld [vmem:[%s235] ss:$2 sm:$0xf]
      %s237 = scalar_lea.vmem %s172, 192
      %v238 = vld [vmem:[%s237] ss:$2 sm:$0xf]
      %s239 = scalar_lea.vmem %s172, 200
      %v240 = vld [vmem:[%s239] ss:$2 sm:$0xf]
      %s241 = scalar_lea.vmem %s172, 208
      %v242 = vld [vmem:[%s241] ss:$2 sm:$0xf]
      %s243 = scalar_lea.vmem %s172, 216
      %v244 = vld [vmem:[%s243] ss:$2 sm:$0xf]
      %s245 = scalar_lea.vmem %s172, 224
      %v246 = vld [vmem:[%s245] ss:$2 sm:$0xf]
      %s247 = scalar_lea.vmem %s172, 232
      %v248 = vld [vmem:[%s247] ss:$2 sm:$0xf]
      %s249 = scalar_lea.vmem %s172, 240
      %v250 = vld [vmem:[%s249] ss:$2 sm:$0xf]
      %s251 = scalar_lea.vmem %s172, 248
      %v252 = vld [vmem:[%s251] ss:$2 sm:$0xf]
      %s253 = scalar_lea.vmem %s172, 1
      %v254 = vld [vmem:[%s253] ss:$2 sm:$0xf]
      %s255 = scalar_lea.vmem %s172, 9
      %v256 = vld [vmem:[%s255] ss:$2 sm:$0xf]
      %s257 = scalar_lea.vmem %s172, 17
      %v258 = vld [vmem:[%s257] ss:$2 sm:$0xf]
      %s259 = scalar_lea.vmem %s172, 25
      %v260 = vld [vmem:[%s259] ss:$2 sm:$0xf]
      %s261 = scalar_lea.vmem %s172, 33
      %v262 = vld [vmem:[%s261] ss:$2 sm:$0xf]
      %s263 = scalar_lea.vmem %s172, 41
      %v264 = vld [vmem:[%s263] ss:$2 sm:$0xf]
      %s265 = scalar_lea.vmem %s172, 49
      %v266 = vld [vmem:[%s265] ss:$2 sm:$0xf]
      %s267 = scalar_lea.vmem %s172, 57
      %v268 = vld [vmem:[%s267] ss:$2 sm:$0xf]
      %s269 = scalar_lea.vmem %s172, 65
      %v270 = vld [vmem:[%s269] ss:$2 sm:$0xf]
      %s271 = scalar_lea.vmem %s172, 73
      %v272 = vld [vmem:[%s271] ss:$2 sm:$0xf]
      %s273 = scalar_lea.vmem %s172, 81
      %v274 = vld [vmem:[%s273] ss:$2 sm:$0xf]
      %s275 = scalar_lea.vmem %s172, 89
      %v276 = vld [vmem:[%s275] ss:$2 sm:$0xf]
      %s277 = scalar_lea.vmem %s172, 97
      %v278 = vld [vmem:[%s277] ss:$2 sm:$0xf]
      %s279 = scalar_lea.vmem %s172, 105
      %v280 = vld [vmem:[%s279] ss:$2 sm:$0xf]
      %s281 = scalar_lea.vmem %s172, 113
      %v282 = vld [vmem:[%s281] ss:$2 sm:$0xf]
      %s283 = scalar_lea.vmem %s172, 121
      %v284 = vld [vmem:[%s283] ss:$2 sm:$0xf]
      %s285 = scalar_lea.vmem %s172, 129
      %v286 = vld [vmem:[%s285] ss:$2 sm:$0xf]
      %s287 = scalar_lea.vmem %s172, 137
      %v288 = vld [vmem:[%s287] ss:$2 sm:$0xf]
      %s289 = scalar_lea.vmem %s172, 145
      %v290 = vld [vmem:[%s289] ss:$2 sm:$0xf]
      %s291 = scalar_lea.vmem %s172, 153
      %v292 = vld [vmem:[%s291] ss:$2 sm:$0xf]
      %s293 = scalar_lea.vmem %s172, 161
      %v294 = vld [vmem:[%s293] ss:$2 sm:$0xf]
      %s295 = scalar_lea.vmem %s172, 169
      %v296 = vld [vmem:[%s295] ss:$2 sm:$0xf]
      %s297 = scalar_lea.vmem %s172, 177
      %v298 = vld [vmem:[%s297] ss:$2 sm:$0xf]
      %s299 = scalar_lea.vmem %s172, 185
      %v300 = vld [vmem:[%s299] ss:$2 sm:$0xf]
      %s301 = scalar_lea.vmem %s172, 193
      %v302 = vld [vmem:[%s301] ss:$2 sm:$0xf]
      %s303 = scalar_lea.vmem %s172, 201
      %v304 = vld [vmem:[%s303] ss:$2 sm:$0xf]
      %s305 = scalar_lea.vmem %s172, 209
      %v306 = vld [vmem:[%s305] ss:$2 sm:$0xf]
      %s307 = scalar_lea.vmem %s172, 217
      %v308 = vld [vmem:[%s307] ss:$2 sm:$0xf]
      %s309 = scalar_lea.vmem %s172, 225
      %v310 = vld [vmem:[%s309] ss:$2 sm:$0xf]
      %s311 = scalar_lea.vmem %s172, 233
      %v312 = vld [vmem:[%s311] ss:$2 sm:$0xf]
      %s313 = scalar_lea.vmem %s172, 241
      %v314 = vld [vmem:[%s313] ss:$2 sm:$0xf]
      %s315 = scalar_lea.vmem %s172, 249
      %v316 = vld [vmem:[%s315] ss:$2 sm:$0xf]
      %v317 = vmax.f32 %v190, %v254
      %v318 = vmax.f32 %v192, %v256
      %v319 = vmax.f32 %v194, %v258
      %v320 = vmax.f32 %v196, %v260
      %v321 = vmax.f32 %v198, %v262
      %v322 = vmax.f32 %v200, %v264
      %v323 = vmax.f32 %v202, %v266
      %v324 = vmax.f32 %v204, %v268
      %v325 = vmax.f32 %v206, %v270
      %v326 = vmax.f32 %v208, %v272
      %v327 = vmax.f32 %v210, %v274
      %v328 = vmax.f32 %v212, %v276
      %v329 = vmax.f32 %v214, %v278
      %v330 = vmax.f32 %v216, %v280
      %v331 = vmax.f32 %v218, %v282
      %v332 = vmax.f32 %v220, %v284
      %v333 = vmax.f32 %v222, %v286
      %v334 = vmax.f32 %v224, %v288
      %v335 = vmax.f32 %v226, %v290
      %v336 = vmax.f32 %v228, %v292
      %v337 = vmax.f32 %v230, %v294
      %v338 = vmax.f32 %v232, %v296
      %v339 = vmax.f32 %v234, %v298
      %v340 = vmax.f32 %v236, %v300
      %v341 = vmax.f32 %v238, %v302
      %v342 = vmax.f32 %v240, %v304
      %v343 = vmax.f32 %v242, %v306
      %v344 = vmax.f32 %v244, %v308
      %v345 = vmax.f32 %v246, %v310
      %v346 = vmax.f32 %v248, %v312
      %v347 = vmax.f32 %v250, %v314
      %v348 = vmax.f32 %v252, %v316
      %v349 = vmax.f32 %v317, %v318
      %v350 = vmax.f32 %v319, %v320
      %v351 = vmax.f32 %v321, %v322
      %v352 = vmax.f32 %v323, %v324
      %v353 = vmax.f32 %v325, %v326
      %v354 = vmax.f32 %v327, %v328
      %v355 = vmax.f32 %v329, %v330
      %v356 = vmax.f32 %v331, %v332
      %v357 = vmax.f32 %v333, %v334
      %v358 = vmax.f32 %v335, %v336
      %v359 = vmax.f32 %v337, %v338
      %v360 = vmax.f32 %v339, %v340
      %v361 = vmax.f32 %v341, %v342
      %v362 = vmax.f32 %v343, %v344
      %v363 = vmax.f32 %v345, %v346
      %v364 = vmax.f32 %v347, %v348
      %381 = vrot.lane.b32.xlu0 %v349, 127
      %v382 = vpop.permute.xlu0 %381
      %383 = vrot.lane.b32.xlu0 %v350, 127
      %v384 = vpop.permute.xlu0 %383
      %385 = vrot.lane.b32.xlu0 %v351, 127
      %v386 = vpop.permute.xlu0 %385
      %387 = vrot.lane.b32.xlu0 %v352, 127
      %v388 = vpop.permute.xlu0 %387
      %389 = vrot.lane.b32.xlu0 %v353, 127
      %v390 = vpop.permute.xlu0 %389
      %391 = vrot.lane.b32.xlu0 %v354, 127
      %v392 = vpop.permute.xlu0 %391
      %393 = vrot.lane.b32.xlu0 %v355, 127
      %v394 = vpop.permute.xlu0 %393
      %395 = vrot.lane.b32.xlu0 %v356, 127
      %v396 = vpop.permute.xlu0 %395
      %397 = vrot.lane.b32.xlu0 %v357, 127
      %v398 = vpop.permute.xlu0 %397
      %399 = vrot.lane.b32.xlu0 %v358, 127
      %v400 = vpop.permute.xlu0 %399
      %401 = vrot.lane.b32.xlu0 %v359, 127
      %v402 = vpop.permute.xlu0 %401
      %403 = vrot.lane.b32.xlu0 %v360, 127
      %v404 = vpop.permute.xlu0 %403
      %405 = vrot.lane.b32.xlu0 %v361, 127
      %v406 = vpop.permute.xlu0 %405
      %407 = vrot.lane.b32.xlu0 %v362, 127
      %v408 = vpop.permute.xlu0 %407
      %409 = vrot.lane.b32.xlu0 %v363, 127
      %v410 = vpop.permute.xlu0 %409
      %411 = vrot.lane.b32.xlu0 %v364, 127
      %v412 = vpop.permute.xlu0 %411
      %429 = vrot.lane.b32.xlu0 %v349, 7
      %v430 = vpop.permute.xlu0 %429
      %431 = vrot.lane.b32.xlu0 %v350, 7
      %v432 = vpop.permute.xlu0 %431
      %433 = vrot.lane.b32.xlu0 %v351, 7
      %v434 = vpop.permute.xlu0 %433
      %435 = vrot.lane.b32.xlu0 %v352, 7
      %v436 = vpop.permute.xlu0 %435
      %437 = vrot.lane.b32.xlu0 %v353, 7
      %v438 = vpop.permute.xlu0 %437
      %439 = vrot.lane.b32.xlu0 %v354, 7
      %v440 = vpop.permute.xlu0 %439
      %441 = vrot.lane.b32.xlu0 %v355, 7
      %v442 = vpop.permute.xlu0 %441
      %443 = vrot.lane.b32.xlu0 %v356, 7
      %v444 = vpop.permute.xlu0 %443
      %445 = vrot.lane.b32.xlu0 %v357, 7
      %v446 = vpop.permute.xlu0 %445
      %447 = vrot.lane.b32.xlu0 %v358, 7
      %v448 = vpop.permute.xlu0 %447
      %449 = vrot.lane.b32.xlu0 %v359, 7
      %v450 = vpop.permute.xlu0 %449
      %451 = vrot.lane.b32.xlu0 %v360, 7
      %v452 = vpop.permute.xlu0 %451
      %453 = vrot.lane.b32.xlu0 %v361, 7
      %v454 = vpop.permute.xlu0 %453
      %455 = vrot.lane.b32.xlu0 %v362, 7
      %v456 = vpop.permute.xlu0 %455
      %457 = vrot.lane.b32.xlu0 %v363, 7
      %v458 = vpop.permute.xlu0 %457
      %459 = vrot.lane.b32.xlu0 %v364, 7
      %v460 = vpop.permute.xlu0 %459
      %vm477 = vcmask 56320
      %v478 = vsel %vm477, %v382, %v430
      %v479 = vsel %vm477, %v384, %v432
      %v480 = vsel %vm477, %v386, %v434
      %v481 = vsel %vm477, %v388, %v436
      %v482 = vsel %vm477, %v390, %v438
      %v483 = vsel %vm477, %v392, %v440
      %v484 = vsel %vm477, %v394, %v442
      %v485 = vsel %vm477, %v396, %v444
      %v486 = vsel %vm477, %v398, %v446
      %v487 = vsel %vm477, %v400, %v448
      %v488 = vsel %vm477, %v402, %v450
      %v489 = vsel %vm477, %v404, %v452
      %v490 = vsel %vm477, %v406, %v454
      %v491 = vsel %vm477, %v408, %v456
      %v492 = vsel %vm477, %v410, %v458
      %v493 = vsel %vm477, %v412, %v460
      %v494 = vmax.f32 %v349, %v478
      %v495 = vmax.f32 %v350, %v479
      %v496 = vmax.f32 %v351, %v480
      %v497 = vmax.f32 %v352, %v481
      %v498 = vmax.f32 %v353, %v482
      %v499 = vmax.f32 %v354, %v483
      %v500 = vmax.f32 %v355, %v484
      %v501 = vmax.f32 %v356, %v485
      %v502 = vmax.f32 %v357, %v486
      %v503 = vmax.f32 %v358, %v487
      %v504 = vmax.f32 %v359, %v488
      %v505 = vmax.f32 %v360, %v489
      %v506 = vmax.f32 %v361, %v490
      %v507 = vmax.f32 %v362, %v491
      %v508 = vmax.f32 %v363, %v492
      %v509 = vmax.f32 %v364, %v493
      %v510 = vlaneseq
      %v511 = vand.u32 %v510, 127
      %v512 = vand.u32 %v511, 1
      %vm513 = vcmp.ne.s32.totalorder %v512, 0
      %530 = vrot.lane.b32.xlu0 %v494, 127
      %v531 = vpop.permute.xlu0 %530
      %532 = vrot.lane.b32.xlu0 %v495, 127
      %v533 = vpop.permute.xlu0 %532
      %534 = vrot.lane.b32.xlu0 %v496, 127
      %v535 = vpop.permute.xlu0 %534
      %536 = vrot.lane.b32.xlu0 %v497, 127
      %v537 = vpop.permute.xlu0 %536
      %538 = vrot.lane.b32.xlu0 %v498, 127
      %v539 = vpop.permute.xlu0 %538
      %540 = vrot.lane.b32.xlu0 %v499, 127
      %v541 = vpop.permute.xlu0 %540
      %542 = vrot.lane.b32.xlu0 %v500, 127
      %v543 = vpop.permute.xlu0 %542
      %544 = vrot.lane.b32.xlu0 %v501, 127
      %v545 = vpop.permute.xlu0 %544
      %546 = vrot.lane.b32.xlu0 %v502, 127
      %v547 = vpop.permute.xlu0 %546
      %548 = vrot.lane.b32.xlu0 %v503, 127
      %v549 = vpop.permute.xlu0 %548
      %550 = vrot.lane.b32.xlu0 %v504, 127
      %v551 = vpop.permute.xlu0 %550
      %552 = vrot.lane.b32.xlu0 %v505, 127
      %v553 = vpop.permute.xlu0 %552
      %554 = vrot.lane.b32.xlu0 %v506, 127
      %v555 = vpop.permute.xlu0 %554
      %556 = vrot.lane.b32.xlu0 %v507, 127
      %v557 = vpop.permute.xlu0 %556
      %558 = vrot.lane.b32.xlu0 %v508, 127
      %v559 = vpop.permute.xlu0 %558
      %560 = vrot.lane.b32.xlu0 %v509, 127
      %v561 = vpop.permute.xlu0 %560
      %578 = vrot.lane.b32.xlu0 %v494, 7
      %v579 = vpop.permute.xlu0 %578
      %580 = vrot.lane.b32.xlu0 %v495, 7
      %v581 = vpop.permute.xlu0 %580
      %582 = vrot.lane.b32.xlu0 %v496, 7
      %v583 = vpop.permute.xlu0 %582
      %584 = vrot.lane.b32.xlu0 %v497, 7
      %v585 = vpop.permute.xlu0 %584
      %586 = vrot.lane.b32.xlu0 %v498, 7
      %v587 = vpop.permute.xlu0 %586
      %588 = vrot.lane.b32.xlu0 %v499, 7
      %v589 = vpop.permute.xlu0 %588
      %590 = vrot.lane.b32.xlu0 %v500, 7
      %v591 = vpop.permute.xlu0 %590
      %592 = vrot.lane.b32.xlu0 %v501, 7
      %v593 = vpop.permute.xlu0 %592
      %594 = vrot.lane.b32.xlu0 %v502, 7
      %v595 = vpop.permute.xlu0 %594
      %596 = vrot.lane.b32.xlu0 %v503, 7
      %v597 = vpop.permute.xlu0 %596
      %598 = vrot.lane.b32.xlu0 %v504, 7
      %v599 = vpop.permute.xlu0 %598
      %600 = vrot.lane.b32.xlu0 %v505, 7
      %v601 = vpop.permute.xlu0 %600
      %602 = vrot.lane.b32.xlu0 %v506, 7
      %v603 = vpop.permute.xlu0 %602
      %604 = vrot.lane.b32.xlu0 %v507, 7
      %v605 = vpop.permute.xlu0 %604
      %606 = vrot.lane.b32.xlu0 %v508, 7
      %v607 = vpop.permute.xlu0 %606
      %608 = vrot.lane.b32.xlu0 %v509, 7
      %v609 = vpop.permute.xlu0 %608
      %v626 = vsel %vm477, %v531, %v579
      %v627 = vsel %vm477, %v533, %v581
      %v628 = vsel %vm477, %v535, %v583
      %v629 = vsel %vm477, %v537, %v585
      %v630 = vsel %vm477, %v539, %v587
      %v631 = vsel %vm477, %v541, %v589
      %v632 = vsel %vm477, %v543, %v591
      %v633 = vsel %vm477, %v545, %v593
      %v634 = vsel %vm477, %v547, %v595
      %v635 = vsel %vm477, %v549, %v597
      %v636 = vsel %vm477, %v551, %v599
      %v637 = vsel %vm477, %v553, %v601
      %v638 = vsel %vm477, %v555, %v603
      %v639 = vsel %vm477, %v557, %v605
      %v640 = vsel %vm477, %v559, %v607
      %v641 = vsel %vm477, %v561, %v609
      %v642 = vsel %vm513, %v626, %v494
      %v643 = vsel %vm513, %v627, %v495
      %v644 = vsel %vm513, %v628, %v496
      %v645 = vsel %vm513, %v629, %v497
      %v646 = vsel %vm513, %v630, %v498
      %v647 = vsel %vm513, %v631, %v499
      %v648 = vsel %vm513, %v632, %v500
      %v649 = vsel %vm513, %v633, %v501
      %v650 = vsel %vm513, %v634, %v502
      %v651 = vsel %vm513, %v635, %v503
      %v652 = vsel %vm513, %v636, %v504
      %v653 = vsel %vm513, %v637, %v505
      %v654 = vsel %vm513, %v638, %v506
      %v655 = vsel %vm513, %v639, %v507
      %v656 = vsel %vm513, %v640, %v508
      %v657 = vsel %vm513, %v641, %v509
      %v658 = vand.u32 %v511, 2
      %vm659 = vcmp.ne.s32.totalorder %v658, 0
      %676 = vrot.lane.b32.xlu0 %v642, 126
      %v677 = vpop.permute.xlu0 %676
      %678 = vrot.lane.b32.xlu0 %v643, 126
      %v679 = vpop.permute.xlu0 %678
      %680 = vrot.lane.b32.xlu0 %v644, 126
      %v681 = vpop.permute.xlu0 %680
      %682 = vrot.lane.b32.xlu0 %v645, 126
      %v683 = vpop.permute.xlu0 %682
      %684 = vrot.lane.b32.xlu0 %v646, 126
      %v685 = vpop.permute.xlu0 %684
      %686 = vrot.lane.b32.xlu0 %v647, 126
      %v687 = vpop.permute.xlu0 %686
      %688 = vrot.lane.b32.xlu0 %v648, 126
      %v689 = vpop.permute.xlu0 %688
      %690 = vrot.lane.b32.xlu0 %v649, 126
      %v691 = vpop.permute.xlu0 %690
      %692 = vrot.lane.b32.xlu0 %v650, 126
      %v693 = vpop.permute.xlu0 %692
      %694 = vrot.lane.b32.xlu0 %v651, 126
      %v695 = vpop.permute.xlu0 %694
      %696 = vrot.lane.b32.xlu0 %v652, 126
      %v697 = vpop.permute.xlu0 %696
      %698 = vrot.lane.b32.xlu0 %v653, 126
      %v699 = vpop.permute.xlu0 %698
      %700 = vrot.lane.b32.xlu0 %v654, 126
      %v701 = vpop.permute.xlu0 %700
      %702 = vrot.lane.b32.xlu0 %v655, 126
      %v703 = vpop.permute.xlu0 %702
      %704 = vrot.lane.b32.xlu0 %v656, 126
      %v705 = vpop.permute.xlu0 %704
      %706 = vrot.lane.b32.xlu0 %v657, 126
      %v707 = vpop.permute.xlu0 %706
      %724 = vrot.lane.b32.xlu0 %v642, 6
      %v725 = vpop.permute.xlu0 %724
      %726 = vrot.lane.b32.xlu0 %v643, 6
      %v727 = vpop.permute.xlu0 %726
      %728 = vrot.lane.b32.xlu0 %v644, 6
      %v729 = vpop.permute.xlu0 %728
      %730 = vrot.lane.b32.xlu0 %v645, 6
      %v731 = vpop.permute.xlu0 %730
      %732 = vrot.lane.b32.xlu0 %v646, 6
      %v733 = vpop.permute.xlu0 %732
      %734 = vrot.lane.b32.xlu0 %v647, 6
      %v735 = vpop.permute.xlu0 %734
      %736 = vrot.lane.b32.xlu0 %v648, 6
      %v737 = vpop.permute.xlu0 %736
      %738 = vrot.lane.b32.xlu0 %v649, 6
      %v739 = vpop.permute.xlu0 %738
      %740 = vrot.lane.b32.xlu0 %v650, 6
      %v741 = vpop.permute.xlu0 %740
      %742 = vrot.lane.b32.xlu0 %v651, 6
      %v743 = vpop.permute.xlu0 %742
      %744 = vrot.lane.b32.xlu0 %v652, 6
      %v745 = vpop.permute.xlu0 %744
      %746 = vrot.lane.b32.xlu0 %v653, 6
      %v747 = vpop.permute.xlu0 %746
      %748 = vrot.lane.b32.xlu0 %v654, 6
      %v749 = vpop.permute.xlu0 %748
      %750 = vrot.lane.b32.xlu0 %v655, 6
      %v751 = vpop.permute.xlu0 %750
      %752 = vrot.lane.b32.xlu0 %v656, 6
      %v753 = vpop.permute.xlu0 %752
      %754 = vrot.lane.b32.xlu0 %v657, 6
      %v755 = vpop.permute.xlu0 %754
      %vm772 = vcmask 48128
      %v773 = vsel %vm772, %v677, %v725
      %v774 = vsel %vm772, %v679, %v727
      %v775 = vsel %vm772, %v681, %v729
      %v776 = vsel %vm772, %v683, %v731
      %v777 = vsel %vm772, %v685, %v733
      %v778 = vsel %vm772, %v687, %v735
      %v779 = vsel %vm772, %v689, %v737
      %v780 = vsel %vm772, %v691, %v739
      %v781 = vsel %vm772, %v693, %v741
      %v782 = vsel %vm772, %v695, %v743
      %v783 = vsel %vm772, %v697, %v745
      %v784 = vsel %vm772, %v699, %v747
      %v785 = vsel %vm772, %v701, %v749
      %v786 = vsel %vm772, %v703, %v751
      %v787 = vsel %vm772, %v705, %v753
      %v788 = vsel %vm772, %v707, %v755
      %v789 = vsel %vm659, %v773, %v642
      %v790 = vsel %vm659, %v774, %v643
      %v791 = vsel %vm659, %v775, %v644
      %v792 = vsel %vm659, %v776, %v645
      %v793 = vsel %vm659, %v777, %v646
      %v794 = vsel %vm659, %v778, %v647
      %v795 = vsel %vm659, %v779, %v648
      %v796 = vsel %vm659, %v780, %v649
      %v797 = vsel %vm659, %v781, %v650
      %v798 = vsel %vm659, %v782, %v651
      %v799 = vsel %vm659, %v783, %v652
      %v800 = vsel %vm659, %v784, %v653
      %v801 = vsel %vm659, %v785, %v654
      %v802 = vsel %vm659, %v786, %v655
      %v803 = vsel %vm659, %v787, %v656
      %v804 = vsel %vm659, %v788, %v657
      %vm805 = vcmask 27648
      %806 = vst.msk [vmem:[%s187] sm:$0xf] %vm805, %v789
      %807 = vst.msk [vmem:[%s187 + $0x4] sm:$0xf] %vm805, %v790
      %808 = vst.msk [vmem:[%s187 + $0x8] sm:$0xf] %vm805, %v791
      %809 = vst.msk [vmem:[%s187 + $0xc] sm:$0xf] %vm805, %v792
      %810 = vst.msk [vmem:[%s187 + $0x10] sm:$0xf] %vm805, %v793
      %811 = vst.msk [vmem:[%s187 + $0x14] sm:$0xf] %vm805, %v794
      %812 = vst.msk [vmem:[%s187 + $0x18] sm:$0xf] %vm805, %v795
      %813 = vst.msk [vmem:[%s187 + $0x1c] sm:$0xf] %vm805, %v796
      %814 = vst.msk [vmem:[%s187 + $0x20] sm:$0xf] %vm805, %v797
      %815 = vst.msk [vmem:[%s187 + $0x24] sm:$0xf] %vm805, %v798
      %816 = vst.msk [vmem:[%s187 + $0x28] sm:$0xf] %vm805, %v799
      %817 = vst.msk [vmem:[%s187 + $0x2c] sm:$0xf] %vm805, %v800
      %818 = vst.msk [vmem:[%s187 + $0x30] sm:$0xf] %vm805, %v801
      %819 = vst.msk [vmem:[%s187 + $0x34] sm:$0xf] %vm805, %v802
      %820 = vst.msk [vmem:[%s187 + $0x38] sm:$0xf] %vm805, %v803
      %821 = vst.msk [vmem:[%s187 + $0x3c] sm:$0xf] %vm805, %v804
      %s822 = smul.u32 4, %s17
      %s823 = smul.u32 4, %s18
      %p824 = scmp.lt.s32.totalorder %s822, 15
      %s825 = scalar_select %p824, %s822, 15
      %p826 = scmp.lt.s32.totalorder %s823, 3
      %s827 = scalar_select %p826, %s823, 3
      %p828 = scmp.lt.s32.totalorder %s19, 0
      %s829 = scalar_select %p828, %s19, 0
      %s830 = sadd.s32 %s829, %s827
      %s831 = smul.addr %s825, 4
      %s832 = sadd.s32 %s830, %s831
      %s833 = smul.addr %s832, 4
      %s834 = scalar_lea.vmem %s1, %s833
      // Predicated region
      $region25: #{tpu_custom_call.1} parent=23 // pred_check
        %p835 = pneg %p83
      $region26: #{tpu_custom_call.1} parent=23 // pred_check_branch
        %837 = sbr.rel (%p835) target = $region28
      $region27: #{tpu_custom_call.1} parent=23 // pred_region
        %s838 = smul.u32 4, %s17
        %s839 = smul.u32 4, %s18
      $region28: #{tpu_custom_call.1} parent=23 // pred_fallthru
        _
    $region24: #{tpu_custom_call.1} parent=5 // pred_fallthru
      _
    %p840 = scmp.le.s32.totalorder 2, %s7
    // Predicated region
    $region29: #{tpu_custom_call.1} parent=5 // pred_check
      %p841 = pneg %p840
    $region30: #{tpu_custom_call.1} parent=5 // pred_check_branch
      %843 = sbr.rel (%p841) target = $region32
    $region31: #{tpu_custom_call.1} parent=5 // pred_region
      %s844 = ssub.s32 %s7, 2
      // Predicated region
      $region33: #{tpu_custom_call.1} parent=31 // pred_check
        %p845 = pneg %p89
      $region34: #{tpu_custom_call.1} parent=31 // pred_check_branch
        %847 = sbr.rel (%p845) target = $region36
      $region35: #{tpu_custom_call.1} parent=31 // pred_region
        %s848 = smul.u32 4, %s20
        %s849 = smul.u32 4, %s21
        %p850 = scmp.lt.s32.totalorder %s848, 15
        %s851 = scalar_select %p850, %s848, 15
        %p852 = scmp.lt.s32.totalorder %s849, 3
        %s853 = scalar_select %p852, %s849, 3
        %p854 = scmp.lt.s32.totalorder %s22, 0
        %s855 = scalar_select %p854, %s22, 0
        %s856 = sadd.s32 %s855, %s853
        %s857 = smul.addr %s851, 4
        %s858 = sadd.s32 %s856, %s857
        %s859 = smul.addr %s858, 4
        %s860 = scalar_lea.vmem %s1, %s859
      $region36: #{tpu_custom_call.1} parent=31 // pred_fallthru
        _
    $region32: #{tpu_custom_call.1} parent=5 // pred_fallthru
      _
  $region6: #{tpu_custom_call.1} parent=0 // loop_footer
    %s11 = sadd.s32 1, %s7
  $region7: #{tpu_custom_call.1} parent=0 // loop_footer_branch
    %6 = sbr.rel target = $region3
  $region8: #{tpu_custom_call.1} parent=0 // loop_exit
    _

</llo_original>
